<compile_context>
chip_gen: v7x
topology: tpu7x:2x2x1
jax: 0.10.0
libtpu: 0.0.40
codegen_flags: <defaults>
</compile_context>

<pallas_src>
import functools

import jax
import jax.numpy as jnp
from jax.experimental import pallas as pl
from jax.experimental.pallas import tpu as pltpu


# --------------------------------------------------------------------------
# Generation-aware VMEM limit (v7x: 64 MiB physical; v5e/v6e: 128 MiB)
# --------------------------------------------------------------------------
def _vmem_limit_bytes():
    try:
        cap = int(pltpu.get_tpu_info().vmem_capacity_bytes)
    except Exception:
        cap = 64 << 20  # conservative fallback (v7x physical size)
    # Leave headroom for compiler-internal scratch / semaphores.
    return min((cap * 3) // 4, 96 << 20)


# --------------------------------------------------------------------------
# Fused single-pass kernel: pool + excite + scale on a resident (bB, C, L) slab
# --------------------------------------------------------------------------
def _fused_se_kernel(x_ref, w1_ref, w2_ref, o_ref, *, L, compute_dtype):
    # x_ref: (bB, C, L) native dtype; w1_ref: (C, Cr); w2_ref: (Cr, C)
    x = x_ref[...]
    # Squeeze: mean over L, accumulated in f32.
    y = jnp.sum(x.astype(jnp.float32), axis=-1) * jnp.float32(1.0 / L)  # (bB, C)
    # Excite: fc1 -> relu -> fc2 -> sigmoid (weights stay in native dtype).
    h = jnp.dot(y.astype(compute_dtype), w1_ref[...],
                preferred_element_type=jnp.float32)                     # (bB, Cr)
    h = jnp.maximum(h, 0.0)
    s = jnp.dot(h.astype(compute_dtype), w2_ref[...],
                preferred_element_type=jnp.float32)                     # (bB, C)
    g = jax.nn.sigmoid(s).astype(x.dtype)                               # (bB, C)
    # Scale and store (x read from HBM exactly once for the whole layer).
    o_ref[...] = x * g[:, :, None]


# --------------------------------------------------------------------------
# Fallback pass 1: squeeze (mean over L) + excitation epilogue
# --------------------------------------------------------------------------
def _pool_excite_kernel(x_ref, w1_ref, w2_ref, gate_ref, acc_ref, *,
                        L, tL, inlane, ragged, compute_dtype):
    # x_ref:    (bB, C, tL)  native dtype
    # w1_ref:   (C, Cr)      fc1 weight, pre-transposed
    # w2_ref:   (Cr, C)      fc2 weight, pre-transposed
    # gate_ref: (bB, C)      f32 lane-dense output gate
    # acc_ref:  (bB, C, 128) f32 in-lane partial sums  (or (bB, C) if tL < 128)
    l = pl.program_id(1)
    n_l = pl.num_programs(1)

    @pl.when(l == 0)
    def _init():
        acc_ref[...] = jnp.zeros_like(acc_ref)

    def _accumulate(xt):
        if inlane:
            # In-lane VPU adds of 128-wide slices; the cross-lane (XLU) reduce
            # happens only once, in the finalize step.
            for j in range(tL // 128):
                acc_ref[...] += xt[:, :, j * 128:(j + 1) * 128].astype(jnp.float32)
        else:
            acc_ref[...] += jnp.sum(xt.astype(jnp.float32), axis=-1)

    if ragged:
        # Unmasked accumulate on all full tiles; mask only the final tile.
        @pl.when(l < n_l - 1)
        def _full_tiles():
            _accumulate(x_ref[...])

        @pl.when(l == n_l - 1)
        def _last_tile():
            xt = x_ref[...]
            lane = jax.lax.broadcasted_iota(jnp.int32, xt.shape, 2)
            valid = (l * tL + lane) < L
            _accumulate(jnp.where(valid, xt, jnp.zeros_like(xt)))
    else:
        _accumulate(x_ref[...])

    @pl.when(l == n_l - 1)
    def _finalize():
        if inlane:
            y = jnp.sum(acc_ref[...], axis=-1) * jnp.float32(1.0 / L)   # (bB, C)
        else:
            y = acc_ref[...] * jnp.float32(1.0 / L)                     # (bB, C)
        h = jnp.dot(y.astype(compute_dtype), w1_ref[...],
                    preferred_element_type=jnp.float32)                 # (bB, Cr)
        h = jnp.maximum(h, 0.0)
        s = jnp.dot(h.astype(compute_dtype), w2_ref[...],
                    preferred_element_type=jnp.float32)                 # (bB, C)
        gate_ref[...] = jax.nn.sigmoid(s)                               # lane-dense


# --------------------------------------------------------------------------
# Fallback pass 2: scale x by the per-(batch, channel) gate (pure elementwise)
# --------------------------------------------------------------------------
def _scale_kernel(x_ref, gate_ref, o_ref):
    # x_ref: (bB, C, tL); gate_ref: (bB, C) f32; o_ref: (bB, C, tL)
    g = gate_ref[...].astype(o_ref.dtype)
    o_ref[...] = x_ref[...] * g[:, :, None]


# --------------------------------------------------------------------------
# Tile selection
# --------------------------------------------------------------------------
def _pick_fused_bB(B, C, L, itemsize, slab_budget):
    """Batch tile for the fused path, or None if a single-batch slab won't fit."""
    per_b = C * L * itemsize
    if per_b <= 0 or per_b > slab_budget:
        return None
    bB = min(B, max(1, slab_budget // per_b))
    if B >= 8:
        # >= 2 B-tiles: both v7x TensorCores participate and the 1-D pipeline
        # has at least two steps to overlap DMA with compute.
        bB = min(bB, B // 2)
    if bB >= 8:
        bB = (bB // 8) * 8
    return max(1, bB)


def _pick_two_pass_tiles(B, C, L, itemsize, tile_bytes):
    # L tile: full L when small, otherwise a lane-aligned multiple of 128
    # capped at 512 (elementwise flatlines near the HBM roofline by 512).
    if L <= 128:
        tL = L
    else:
        tL = max(128, min(512, (L // 128) * 128))
    per_b = C * tL * itemsize
    bB = max(1, tile_bytes // per_b)
    if bB >= B:
        bB = B
    elif bB >= 8:
        bB = (bB // 8) * 8
    else:
        bB = min(8, B)
    # v7x megacore: pass 1's only "parallel" axis is B, so guarantee >= 2
    # B-tiles when we can keep bB a multiple of 8 (keeps the 2-D gate block
    # layout-legal).
    if B >= 16 and bB >= B:
        half = ((B // 2) // 8) * 8
        if half >= 8:
            bB = half
    return bB, tL


# --------------------------------------------------------------------------
# Wrapper
# --------------------------------------------------------------------------
def se_layer(x, w1, w2, *, max_fused_block_bytes=None):
    """Squeeze-and-Excitation forward.

    x:  (B, C, L)
    w1: (C//r, C)  fc1 weight (PyTorch layout: out, in)
    w2: (C, C//r)  fc2 weight
    """
    B, C, L = x.shape
    Cr = w1.shape[0]
    assert w1.shape == (Cr, C) and w2.shape == (C, Cr)

    itemsize = jnp.dtype(x.dtype).itemsize
    w_itemsize = jnp.dtype(w1.dtype).itemsize
    # Feed low-precision weights to the MXU in their native dtype.
    compute_dtype = w1.dtype if w_itemsize < 4 else jnp.float32

    # Pre-transpose weights in the wrapper so both in-kernel dots contract
    # lhs dim1 x rhs dim0 (no in-kernel XLU transpose of resident weights).
    w1t = jnp.transpose(w1)          # (C, Cr)
    w2t = jnp.transpose(w2)          # (Cr, C)

    vmem_limit = _vmem_limit_bytes()
    w_bytes = w1.size * w_itemsize + w2.size * w_itemsize

    # ---------------- fused single-pass path ---------------------------------
    # VMEM ~= 2 * x block (double-buffered) + 2 * out block + weights + slack.
    slab_budget = max(0, (vmem_limit - w_bytes - (2 << 20))) // 4
    if max_fused_block_bytes is not None:
        slab_budget = min(slab_budget, max_fused_block_bytes)
    bB_f = _pick_fused_bB(B, C, L, itemsize, slab_budget)

    if bB_f is not None:
        nB = pl.cdiv(B, bB_f)
        fused_cost = pl.CostEstimate(
            flops=2 * B * C * L + 4 * B * C * Cr,
            transcendentals=B * C,
            bytes_accessed=2 * x.size * itemsize + w_bytes)
        return pl.pallas_call(
            functools.partial(_fused_se_kernel, L=L, compute_dtype=compute_dtype),
            out_shape=jax.ShapeDtypeStruct((B, C, L), x.dtype),
            grid_spec=pltpu.PrefetchScalarGridSpec(
                num_scalar_prefetch=0,
                grid=(nB,),
                in_specs=[
                    pl.BlockSpec((bB_f, C, L), lambda b: (b, 0, 0)),
                    pl.BlockSpec((C, Cr), lambda b: (0, 0)),   # resident
                    pl.BlockSpec((Cr, C), lambda b: (0, 0)),   # resident
                ],
                out_specs=pl.BlockSpec((bB_f, C, L), lambda b: (b, 0, 0)),
            ),
            compiler_params=pltpu.CompilerParams(
                dimension_semantics=("parallel",),
                vmem_limit_bytes=vmem_limit),
            cost_estimate=fused_cost,
        )(x, w1t, w2t)

    # ---------------- two-pass fallback (huge C*L slabs) ----------------------
    tile_bytes = min(8 << 20, vmem_limit // 6)
    bB, tL = _pick_two_pass_tiles(B, C, L, itemsize, tile_bytes)
    nB = pl.cdiv(B, bB)
    nL = pl.cdiv(L, tL)
    inlane = (tL % 128 == 0)
    ragged = (L % tL != 0)
    acc_shape = (bB, C, 128) if inlane else (bB, C)

    # Pass 1: gate = sigmoid(fc2(relu(fc1(mean(x)))))  -> lane-dense (B, C) f32
    pool_cost = pl.CostEstimate(
        flops=B * C * L + 4 * B * C * Cr,
        transcendentals=B * C,
        bytes_accessed=x.size * itemsize + w_bytes + B * C * 4)
    gate = pl.pallas_call(
        functools.partial(_pool_excite_kernel, L=L, tL=tL, inlane=inlane,
                          ragged=ragged, compute_dtype=compute_dtype),
        out_shape=jax.ShapeDtypeStruct((B, C), jnp.float32),
        grid_spec=pltpu.PrefetchScalarGridSpec(
            num_scalar_prefetch=0,
            grid=(nB, nL),                               # reduction axis (L) last
            in_specs=[
                pl.BlockSpec((bB, C, tL), lambda b, l: (b, 0, l)),
                pl.BlockSpec((C, Cr), lambda b, l: (0, 0)),   # resident
                pl.BlockSpec((Cr, C), lambda b, l: (0, 0)),   # resident
            ],
            out_specs=pl.BlockSpec((bB, C), lambda b, l: (b, 0)),
            scratch_shapes=[pltpu.VMEM(acc_shape, jnp.float32)],
        ),
        compiler_params=pltpu.CompilerParams(
            dimension_semantics=("parallel", "arbitrary"),
            vmem_limit_bytes=vmem_limit),
        cost_estimate=pool_cost,
    )(x, w1t, w2t)

    # Pass 2: out = x * gate
    # TODO(synk): for L < 128 a lane-dense (B, C*L) view of pass 2 would avoid
    # masked stores, but that case is always served by the fused path above.
    scale_cost = pl.CostEstimate(
        flops=B * C * L,
        transcendentals=0,
        bytes_accessed=2 * x.size * itemsize + B * C * 4)
    out = pl.pallas_call(
        _scale_kernel,
        out_shape=jax.ShapeDtypeStruct((B, C, L), x.dtype),
        grid_spec=pltpu.PrefetchScalarGridSpec(
            num_scalar_prefetch=0,
            grid=(nB, nL),
            in_specs=[
                pl.BlockSpec((bB, C, tL), lambda b, l: (b, 0, l)),
                pl.BlockSpec((bB, C), lambda b, l: (b, 0)),
            ],
            out_specs=pl.BlockSpec((bB, C, tL), lambda b, l: (b, 0, l)),
        ),
        compiler_params=pltpu.CompilerParams(
            dimension_semantics=("parallel", "parallel"),   # v7x: 2 TCs
            vmem_limit_bytes=vmem_limit),
        cost_estimate=scale_cost,
    )(x, gate)
    return out


# --------------------------------------------------------------------------
# Pure-JAX reference matching the PyTorch forward
# --------------------------------------------------------------------------
def se_layer_ref(x, w1, w2):
    y = jnp.mean(x.astype(jnp.float32), axis=-1)             # (B, C)
    y = jnp.maximum(y @ w1.astype(jnp.float32).T, 0.0)       # (B, Cr)
    y = jax.nn.sigmoid(y @ w2.astype(jnp.float32).T)         # (B, C)
    return (x.astype(jnp.float32) * y[:, :, None]).astype(x.dtype)


if __name__ == "__main__":
    key = jax.random.PRNGKey(0)
    kx, k1, k2, k3, k4, k5 = jax.random.split(key, 6)

    # Test 1: small shapes consistent with the module (reduction=16) -> fused path.
    B, C, L = 2, 32, 16
    Cr = C // 16
    x = jax.random.normal(kx, (B, C, L), dtype=jnp.float32)
    w1 = jax.random.normal(k1, (Cr, C), dtype=jnp.float32) * (1.0 / C) ** 0.5
    w2 = jax.random.normal(k2, (C, Cr), dtype=jnp.float32) * (1.0 / Cr) ** 0.5

    out = jax.block_until_ready(se_layer(x, w1, w2))
    ref = se_layer_ref(x, w1, w2)
    assert out.shape == (B, C, L)
    assert jnp.allclose(out, ref, atol=1e-5, rtol=1e-5), "mismatch (fused, small)"

    # Test 2: larger, ragged-L shape -> still fused (whole-L slab fits VMEM).
    B2, C2, L2 = 16, 64, 1000
    Cr2 = C2 // 16
    x2 = jax.random.normal(k3, (B2, C2, L2), dtype=jnp.float32)
    w1b = jax.random.normal(k4, (Cr2, C2), dtype=jnp.float32) * (1.0 / C2) ** 0.5
    w2b = jax.random.normal(k5, (C2, Cr2), dtype=jnp.float32) * (1.0 / Cr2) ** 0.5

    out2 = jax.block_until_ready(se_layer(x2, w1b, w2b))
    ref2 = se_layer_ref(x2, w1b, w2b)
    assert out2.shape == (B2, C2, L2)
    assert jnp.allclose(out2, ref2, atol=1e-4, rtol=1e-4), "mismatch (fused, large)"

    # Test 3: force the two-pass fallback on the same inputs, exercising the
    # in-lane pooling accumulator, the predicated ragged-L mask, the lane-dense
    # (B, C) gate and the elementwise scale pass.
    out3 = jax.block_until_ready(se_layer(x2, w1b, w2b, max_fused_block_bytes=0))
    assert jnp.allclose(out3, ref2, atol=1e-4, rtol=1e-4), "mismatch (two-pass)"

    print("KERNEL_OK")
</pallas_src>

<mosaic_0001>
module attributes {stable_mosaic.version = 11 : i64} {
  func.func @_fused_se_kernel(%arg0: i32, %arg1: memref<2x32x16xf32, #tpu.memory_space<vmem>>, %arg2: memref<32x2xf32, #tpu.memory_space<vmem>>, %arg3: memref<2x32xf32, #tpu.memory_space<vmem>>, %arg4: memref<2x32x16xf32, #tpu.memory_space<vmem>>) attributes {dimension_semantics = [#tpu.dimension_semantics<parallel>], iteration_bounds = array<i64: 1>, scalar_prefetch = 0 : i64, scratch_operands = 0 : i64, tpu.core_type = #tpu.core_type<tc>, window_params = [{transform_indices = @transform_0, window_bounds = array<i64: 2, 32, 16>}, {pipeline_mode = #tpu.pipeline_mode<synchronous>, transform_indices = @transform_1, window_bounds = array<i64: 32, 2>}, {pipeline_mode = #tpu.pipeline_mode<synchronous>, transform_indices = @transform_2, window_bounds = array<i64: 2, 32>}, {transform_indices = @transform_3, window_bounds = array<i64: 2, 32, 16>}]} {
    %c0 = arith.constant 0 : index
    %c0_0 = arith.constant 0 : index
    %c0_1 = arith.constant 0 : index
    %0 = vector.load %arg1[%c0, %c0_0, %c0_1] : memref<2x32x16xf32, #tpu.memory_space<vmem>>, vector<2x32x16xf32>
    %cst = arith.constant dense<0.000000e+00> : vector<2x32xf32>
    %1 = vector.multi_reduction <add>, %0, %cst [2] : vector<2x32x16xf32> to vector<2x32xf32>
    %cst_2 = arith.constant 6.250000e-02 : f32
    %2 = vector.broadcast %cst_2 : f32 to vector<2x32xf32>
    %3 = arith.mulf %1, %2 : vector<2x32xf32>
    %c0_3 = arith.constant 0 : index
    %c0_4 = arith.constant 0 : index
    %4 = vector.load %arg2[%c0_3, %c0_4] : memref<32x2xf32, #tpu.memory_space<vmem>>, vector<32x2xf32>
    %cst_5 = arith.constant dense<0.000000e+00> : vector<2x2xf32>
    %5 = tpu.matmul %3, %4, %cst_5 {dimension_numbers = #tpu.dot_dimension_numbers<[1], [0], [0], [1], [0, 0, 1, 1], [], []>} : vector<2x32xf32>, vector<32x2xf32>, vector<2x2xf32> -> vector<2x2xf32>
    %cst_6 = arith.constant 0.000000e+00 : f32
    %6 = vector.broadcast %cst_6 : f32 to vector<2x2xf32>
    %7 = arith.maximumf %5, %6 : vector<2x2xf32>
    %c0_7 = arith.constant 0 : index
    %c0_8 = arith.constant 0 : index
    %8 = vector.load %arg3[%c0_7, %c0_8] : memref<2x32xf32, #tpu.memory_space<vmem>>, vector<2x32xf32>
    %cst_9 = arith.constant dense<0.000000e+00> : vector<2x32xf32>
    %9 = tpu.matmul %7, %8, %cst_9 {dimension_numbers = #tpu.dot_dimension_numbers<[1], [0], [0], [1], [0, 0, 1, 1], [], []>} : vector<2x2xf32>, vector<2x32xf32>, vector<2x32xf32> -> vector<2x32xf32>
    %10 = arith.negf %9 : vector<2x32xf32>
    %11 = math.exp %10 : vector<2x32xf32>
    %cst_10 = arith.constant 1.000000e+00 : f32
    %12 = vector.broadcast %cst_10 : f32 to vector<2x32xf32>
    %13 = arith.addf %12, %11 : vector<2x32xf32>
    %14 = arith.divf %12, %13 : vector<2x32xf32>
    %15 = vector.shape_cast %14 : vector<2x32xf32> to vector<2x32x1xf32>
    %16 = vector.broadcast %15 : vector<2x32x1xf32> to vector<2x32x16xf32>
    %17 = arith.mulf %0, %16 : vector<2x32x16xf32>
    %c0_11 = arith.constant 0 : index
    %c0_12 = arith.constant 0 : index
    %c0_13 = arith.constant 0 : index
    %18 = vector.load %arg4[%c0_11, %c0_12, %c0_13] : memref<2x32x16xf32, #tpu.memory_space<vmem>>, vector<2x32x16xf32>
    tpu.vector_store %arg4[%c0_11, %c0_12, %c0_13], %17 {strides = array<i32>} : memref<2x32x16xf32, #tpu.memory_space<vmem>>, vector<2x32x16xf32>,
    return
  }
  func.func @transform_0(%arg0: i32) -> (i32, i32, i32) {
    %c0_i32 = arith.constant 0 : i32
    %c0_i32_0 = arith.constant 0 : i32
    %c0_i32_1 = arith.constant 0 : i32
    return %arg0, %c0_i32, %c0_i32_0 : i32, i32, i32
  }
  func.func @transform_1(%arg0: i32) -> (i32, i32) {
    %c0_i32 = arith.constant 0 : i32
    %c0_i32_0 = arith.constant 0 : i32
    %c0_i32_1 = arith.constant 0 : i32
    return %c0_i32, %c0_i32_0 : i32, i32
  }
  func.func @transform_2(%arg0: i32) -> (i32, i32) {
    %c0_i32 = arith.constant 0 : i32
    %c0_i32_0 = arith.constant 0 : i32
    %c0_i32_1 = arith.constant 0 : i32
    return %c0_i32, %c0_i32_0 : i32, i32
  }
  func.func @transform_3(%arg0: i32) -> (i32, i32, i32) {
    %c0_i32 = arith.constant 0 : i32
    %c0_i32_0 = arith.constant 0 : i32
    %c0_i32_1 = arith.constant 0 : i32
    return %arg0, %c0_i32, %c0_i32_0 : i32, i32, i32
  }
}

</mosaic_0001>

<llo_original>
// kernel: tpu_custom_call.1
$region0: #{tpu_custom_call.1}
  #allocation0 [shape = 'u32[]', space=smem, size = 0x4, offset = 0x4, fixed_abs, tag = 'smem constant byte address 0x4 - core index']
  #allocation1 [shape = 'u32[144,128]{1,0:T(1,128)}', space=vmem, size = 0x12000, scoped, tag = 'internal scratch']
  %s0 = inlined_call_operand.vmem [shape: f32[2,32,16], index: 0, kind: input, shape index: {}]
  %s1 = inlined_call_operand.vmem [shape: f32[32,2], index: 1, kind: input, shape index: {}]
  %s2 = inlined_call_operand.vmem [shape: f32[2,32], index: 2, kind: input, shape index: {}]
  %s3 = inlined_call_operand.vmem [shape: f32[2,32,16], index: 3, kind: output, shape index: {}]
  %s4 = sld [smem:[#allocation0]]
  $region22: #{tpu_custom_call.1} parent=0
    _
  %s6 = ssub.s32 1, %s4
  %s7 = scalar_select 0, %s6, %s4
  // Predicated region
  $region2: #{tpu_custom_call.1} parent=0 // pred_check
    _
  $region3: #{tpu_custom_call.1} parent=0 // pred_check_branch
    %9 = sbr.rel (0) target = $region5
  $region4: #{tpu_custom_call.1} parent=0 // pred_region
    _
  $region5: #{tpu_custom_call.1} parent=0 // pred_fallthru
    _
  // Predicated region
  $region6: #{tpu_custom_call.1} parent=0 // pred_check
    _
  $region7: #{tpu_custom_call.1} parent=0 // pred_check_branch
    %11 = sbr.rel (0) target = $region9
  $region8: #{tpu_custom_call.1} parent=0 // pred_region
    _
  $region9: #{tpu_custom_call.1} parent=0 // pred_fallthru
    _
  // Predicated region
  $region10: #{tpu_custom_call.1} parent=0 // pred_check
    _
  $region11: #{tpu_custom_call.1} parent=0 // pred_check_branch
    %13 = sbr.rel (0) target = $region13
  $region12: #{tpu_custom_call.1} parent=0 // pred_region
    _
  $region13: #{tpu_custom_call.1} parent=0 // pred_fallthru
    _
  %v14 = vld [vmem:[%s0] sm:$0xff]
  %v15 = vld [vmem:[%s0 + $0x8] sm:$0xff]
  %v16 = vld [vmem:[%s0 + $0x10] sm:$0xff]
  %v17 = vld [vmem:[%s0 + $0x18] sm:$0xff]
  %v18 = vld [vmem:[%s0 + $0x20] sm:$0xff]
  %v19 = vld [vmem:[%s0 + $0x28] sm:$0xff]
  %v20 = vld [vmem:[%s0 + $0x30] sm:$0xff]
  %v21 = vld [vmem:[%s0 + $0x38] sm:$0xff]
  %vm22 = vcmask 130048
  %v23 = vsel %vm22, %v14, 0.0
  %24 = vadd.xlane.f32.xlu0 %v23
  %v25 = vpop.xlane.xlu0 %24
  %v26 = vsel %vm22, %v15, 0.0
  %27 = vadd.xlane.f32.xlu0 %v26
  %v28 = vpop.xlane.xlu0 %27
  %v29 = vsel %vm22, %v16, 0.0
  %30 = vadd.xlane.f32.xlu0 %v29
  %v31 = vpop.xlane.xlu0 %30
  %v32 = vsel %vm22, %v17, 0.0
  %33 = vadd.xlane.f32.xlu0 %v32
  %v34 = vpop.xlane.xlu0 %33
  %v35 = vsel %vm22, %v18, 0.0
  %36 = vadd.xlane.f32.xlu0 %v35
  %v37 = vpop.xlane.xlu0 %36
  %v38 = vsel %vm22, %v19, 0.0
  %39 = vadd.xlane.f32.xlu0 %v38
  %v40 = vpop.xlane.xlu0 %39
  %v41 = vsel %vm22, %v20, 0.0
  %42 = vadd.xlane.f32.xlu0 %v41
  %v43 = vpop.xlane.xlu0 %42
  %v44 = vsel %vm22, %v21, 0.0
  %45 = vadd.xlane.f32.xlu0 %v44
  %v46 = vpop.xlane.xlu0 %45
  %v47 = vmul.f32 %v25, 0.0625
  %v48 = vmul.f32 %v28, 0.0625
  %v49 = vmul.f32 %v31, 0.0625
  %v50 = vmul.f32 %v34, 0.0625
  %v51 = vmul.f32 %v37, 0.0625
  %v52 = vmul.f32 %v40, 0.0625
  %v53 = vmul.f32 %v43, 0.0625
  %v54 = vmul.f32 %v46, 0.0625
  %v55 = vld [vmem:[%s1] sm:$0xff]
  %v56 = vld [vmem:[%s1 + $0x8] sm:$0xff]
  %v57 = vld [vmem:[%s1 + $0x10] sm:$0xff]
  %v58 = vld [vmem:[%s1 + $0x18] sm:$0xff]
  %v67 = vlaneseq
  %v68 = vand.u32 %v67, 127
  %v69 = vlaneseq
  %v70 = vshrl.u32 %v69, 7
  %v71 = vsub.s32 %v68, %v70
  %v72 = vrot.slane %v47, %v71
  %v73 = vadd.s32 %v68, 4294967288
  %v74 = vlaneseq
  %v75 = vshrl.u32 %v74, 7
  %v76 = vsub.s32 %v73, %v75
  %v77 = vrot.slane %v48, %v76
  %vm78 = vcmask 130112
  %v79 = vsel %vm78, %v77, %v72
  %v80 = vadd.s32 %v68, 4294967280
  %v81 = vlaneseq
  %v82 = vshrl.u32 %v81, 7
  %v83 = vsub.s32 %v80, %v82
  %v84 = vrot.slane %v49, %v83
  %vm85 = vcmask 195712
  %v86 = vsel %vm85, %v84, %v79
  %v87 = vadd.s32 %v68, 4294967272
  %v88 = vlaneseq
  %v89 = vshrl.u32 %v88, 7
  %v90 = vsub.s32 %v87, %v89
  %v91 = vrot.slane %v50, %v90
  %vm92 = vcmask 261312
  %v93 = vsel %vm92, %v91, %v86
  %v94 = vlaneseq
  %v95 = vshrl.u32 %v94, 7
  %v96 = vsub.s32 %v68, %v95
  %v97 = vrot.slane %v51, %v96
  %v98 = vlaneseq
  %v99 = vshrl.u32 %v98, 7
  %v100 = vsub.s32 %v73, %v99
  %v101 = vrot.slane %v52, %v100
  %v102 = vsel %vm78, %v101, %v97
  %v103 = vlaneseq
  %v104 = vshrl.u32 %v103, 7
  %v105 = vsub.s32 %v80, %v104
  %v106 = vrot.slane %v53, %v105
  %v107 = vsel %vm85, %v106, %v102
  %v108 = vlaneseq
  %v109 = vshrl.u32 %v108, 7
  %v110 = vsub.s32 %v87, %v109
  %v111 = vrot.slane %v54, %v110
  %v112 = vsel %vm92, %v111, %v107
  %vm113 = vcmask 1041409
  %v114 = vsel %vm113, %v112, %v93
  %vm115 = vcmask 261120
  %v116 = vsel %vm115, %v114, 0
  %118 = vmatprep.subr.mxu0 0.0
  %119 = vmatpush1.msra.mxu0 %v55
  %120 = vmatprep.subr.mxu0 0.0
  %121 = vmatpush1.msra.mxu0 %v56
  %122 = vmatprep.subr.mxu0 0.0
  %123 = vmatpush1.msra.mxu0 %v57
  %124 = vmatprep.subr.mxu0 0.0
  %125 = vmatpush1.msra.mxu0 %v58
  %126 = vmatprep.subr.mxu0 0.0
  %127 = vmatpush1.msra.mxu0 0.0
  %128 = vmatprep.subr.mxu0 0.0
  %129 = vmatpush1.msra.mxu0 0.0
  %130 = vmatprep.subr.mxu0 0.0
  %131 = vmatpush1.msra.mxu0 0.0
  %132 = vmatprep.subr.mxu0 0.0
  %133 = vmatpush1.msra.mxu0 0.0
  %134 = vmatprep.subr.mxu0 0.0
  %135 = vmatpush1.msra.mxu0 0.0
  %136 = vmatprep.subr.mxu0 0.0
  %137 = vmatpush1.msra.mxu0 0.0
  %138 = vmatprep.subr.mxu0 0.0
  %139 = vmatpush1.msra.mxu0 0.0
  %140 = vmatprep.subr.mxu0 0.0
  %141 = vmatpush1.msra.mxu0 0.0
  %142 = vmatprep.subr.mxu0 0.0
  %143 = vmatpush1.msra.mxu0 0.0
  %144 = vmatprep.subr.mxu0 0.0
  %145 = vmatpush1.msra.mxu0 0.0
  %146 = vmatprep.subr.mxu0 0.0
  %147 = vmatpush1.msra.mxu0 0.0
  %148 = vmatprep.subr.mxu0 0.0
  %149 = vmatpush1.msra.mxu0 0.0
  %150 = vmatprep.subr.mxu0 0.0
  %151 = vmatpush1.msra.mxu0 0.0
  %152 = vmatprep.subr.mxu0 0.0
  %153 = vmatpush1.msra.mxu0 0.0
  %154 = vmatprep.subr.mxu0 0.0
  %155 = vmatpush1.msra.mxu0 0.0
  %156 = vmatprep.subr.mxu0 0.0
  %157 = vmatpush1.msra.mxu0 0.0
  %158 = vmatprep.subr.mxu0 0.0
  %159 = vmatpush1.msra.mxu0 0.0
  %160 = vmatprep.subr.mxu0 0.0
  %161 = vmatpush1.msra.mxu0 0.0
  %162 = vmatprep.subr.mxu0 0.0
  %163 = vmatpush1.msra.mxu0 0.0
  %164 = vmatprep.subr.mxu0 0.0
  %165 = vmatpush1.msra.mxu0 0.0
  %166 = vmatprep.subr.mxu0 0.0
  %167 = vmatpush1.msra.mxu0 0.0
  %168 = vmatprep.subr.mxu0 0.0
  %169 = vmatpush1.msra.mxu0 0.0
  %170 = vmatprep.subr.mxu0 0.0
  %171 = vmatpush1.msra.mxu0 0.0
  %172 = vmatprep.subr.mxu0 0.0
  %173 = vmatpush1.msra.mxu0 0.0
  %174 = vmatprep.subr.mxu0 0.0
  %175 = vmatpush1.msra.mxu0 0.0
  %176 = vmatprep.subr.mxu0 0.0
  %177 = vmatpush1.msra.mxu0 0.0
  %178 = vmatprep.subr.mxu0 0.0
  %179 = vmatpush1.msra.mxu0 0.0
  %180 = vmatprep.subr.mxu0 0.0
  %181 = vmatpush1.msra.mxu0 0.0
  %182 = vmatprep.mubr.f32.mxu0 0.0
  %183 = vmatmul.mubr.f32.gmra.mrb[0].mxu0 %v116
  %v184 = vpop.f32.mrb[0].mxu0
  %v185 = vadd.f32 0.0, %v184
  %v186 = vpop.f32.mrb[0].mxu0
  %187 = vdwg.mxu0
  %v188 = vmax.f32 %v185, 0.0
  %v189 = vld [vmem:[%s2] sm:$0x3]
  %vm190 = vcmask 15360
  %v192 = vsel %vm190, %v188, 0
  %vm194 = vcmask 1041408
  %v196 = vsel %vm194, %v189, 0
  %198 = vmatprep.subr.mxu0 0.0
  %199 = vmatpush1.msra.mxu0 %v196
  %200 = vmatprep.subr.mxu0 0.0
  %201 = vmatpush1.msra.mxu0 0.0
  %202 = vmatprep.subr.mxu0 0.0
  %203 = vmatpush1.msra.mxu0 0.0
  %204 = vmatprep.subr.mxu0 0.0
  %205 = vmatpush1.msra.mxu0 0.0
  %206 = vmatprep.subr.mxu0 0.0
  %207 = vmatpush1.msra.mxu0 0.0
  %208 = vmatprep.subr.mxu0 0.0
  %209 = vmatpush1.msra.mxu0 0.0
  %210 = vmatprep.subr.mxu0 0.0
  %211 = vmatpush1.msra.mxu0 0.0
  %212 = vmatprep.subr.mxu0 0.0
  %213 = vmatpush1.msra.mxu0 0.0
  %214 = vmatprep.subr.mxu0 0.0
  %215 = vmatpush1.msra.mxu0 0.0
  %216 = vmatprep.subr.mxu0 0.0
  %217 = vmatpush1.msra.mxu0 0.0
  %218 = vmatprep.subr.mxu0 0.0
  %219 = vmatpush1.msra.mxu0 0.0
  %220 = vmatprep.subr.mxu0 0.0
  %221 = vmatpush1.msra.mxu0 0.0
  %222 = vmatprep.subr.mxu0 0.0
  %223 = vmatpush1.msra.mxu0 0.0
  %224 = vmatprep.subr.mxu0 0.0
  %225 = vmatpush1.msra.mxu0 0.0
  %226 = vmatprep.subr.mxu0 0.0
  %227 = vmatpush1.msra.mxu0 0.0
  %228 = vmatprep.subr.mxu0 0.0
  %229 = vmatpush1.msra.mxu0 0.0
  %230 = vmatprep.subr.mxu0 0.0
  %231 = vmatpush1.msra.mxu0 0.0
  %232 = vmatprep.subr.mxu0 0.0
  %233 = vmatpush1.msra.mxu0 0.0
  %234 = vmatprep.subr.mxu0 0.0
  %235 = vmatpush1.msra.mxu0 0.0
  %236 = vmatprep.subr.mxu0 0.0
  %237 = vmatpush1.msra.mxu0 0.0
  %238 = vmatprep.subr.mxu0 0.0
  %239 = vmatpush1.msra.mxu0 0.0
  %240 = vmatprep.subr.mxu0 0.0
  %241 = vmatpush1.msra.mxu0 0.0
  %242 = vmatprep.subr.mxu0 0.0
  %243 = vmatpush1.msra.mxu0 0.0
  %244 = vmatprep.subr.mxu0 0.0
  %245 = vmatpush1.msra.mxu0 0.0
  %246 = vmatprep.subr.mxu0 0.0
  %247 = vmatpush1.msra.mxu0 0.0
  %248 = vmatprep.subr.mxu0 0.0
  %249 = vmatpush1.msra.mxu0 0.0
  %250 = vmatprep.subr.mxu0 0.0
  %251 = vmatpush1.msra.mxu0 0.0
  %252 = vmatprep.subr.mxu0 0.0
  %253 = vmatpush1.msra.mxu0 0.0
  %254 = vmatprep.subr.mxu0 0.0
  %255 = vmatpush1.msra.mxu0 0.0
  %256 = vmatprep.subr.mxu0 0.0
  %257 = vmatpush1.msra.mxu0 0.0
  %258 = vmatprep.subr.mxu0 0.0
  %259 = vmatpush1.msra.mxu0 0.0
  %260 = vmatprep.subr.mxu0 0.0
  %261 = vmatpush1.msra.mxu0 0.0
  %262 = vmatprep.mubr.f32.mxu0 0.0
  %263 = vmatmul.mubr.f32.gmra.mrb[0].mxu0 %v192
  %v264 = vpop.f32.mrb[0].mxu0
  %v265 = vadd.f32 0.0, %v264
  %v266 = vpop.f32.mrb[0].mxu0
  %267 = vdwg.mxu0
  %v268 = vxor.u32 %v265, 2147483648
  %v269 = vmul.f32 %v268, 1.442695
  %v270 = vpow.pop %v269
  %v271 = vadd.f32 %v270, 1.0
  %v272 = vrcp.pop %v271
  %v273 = vmul.f32 1.0, %v272
  %v274 = vlaneseq
  %v275 = vshrl.u32 %v274, 7
  %v276 = vsub.s32 0, %v275
  %v277 = vrot.slane %v273, %v276
  %279 = vbcast.lane.b32.xlu0 %v277, 256
  %v280 = vpop.permute.xlu0 %279
  %s282 = sor.u32 256, 8
  %283 = vbcast.lane.b32.xlu0 %v277, %s282
  %v284 = vpop.permute.xlu0 %283
  %s286 = sor.u32 256, 16
  %287 = vbcast.lane.b32.xlu0 %v277, %s286
  %v288 = vpop.permute.xlu0 %287
  %s290 = sor.u32 256, 24
  %291 = vbcast.lane.b32.xlu0 %v277, %s290
  %v292 = vpop.permute.xlu0 %291
  %v293 = vlaneseq
  %v294 = vshrl.u32 %v293, 7
  %v295 = vsub.s32 1, %v294
  %v296 = vrot.slane %v273, %v295
  %298 = vbcast.lane.b32.xlu0 %v296, 256
  %v299 = vpop.permute.xlu0 %298
  %s301 = sor.u32 256, 8
  %302 = vbcast.lane.b32.xlu0 %v296, %s301
  %v303 = vpop.permute.xlu0 %302
  %s305 = sor.u32 256, 16
  %306 = vbcast.lane.b32.xlu0 %v296, %s305
  %v307 = vpop.permute.xlu0 %306
  %s309 = sor.u32 256, 24
  %310 = vbcast.lane.b32.xlu0 %v296, %s309
  %v311 = vpop.permute.xlu0 %310
  %v312 = vmul.f32 %v14, %v280
  %v313 = vmul.f32 %v15, %v284
  %v314 = vmul.f32 %v16, %v288
  %v315 = vmul.f32 %v17, %v292
  %v316 = vmul.f32 %v18, %v299
  %v317 = vmul.f32 %v19, %v303
  %v318 = vmul.f32 %v20, %v307
  %v319 = vmul.f32 %v21, %v311
  %320 = vst.msk [vmem:[%s3] sm:$0xff] %vm22, %v312
  %321 = vst.msk [vmem:[%s3 + $0x8] sm:$0xff] %vm22, %v313
  %322 = vst.msk [vmem:[%s3 + $0x10] sm:$0xff] %vm22, %v314
  %323 = vst.msk [vmem:[%s3 + $0x18] sm:$0xff] %vm22, %v315
  %324 = vst.msk [vmem:[%s3 + $0x20] sm:$0xff] %vm22, %v316
  %325 = vst.msk [vmem:[%s3 + $0x28] sm:$0xff] %vm22, %v317
  %326 = vst.msk [vmem:[%s3 + $0x30] sm:$0xff] %vm22, %v318
  %327 = vst.msk [vmem:[%s3 + $0x38] sm:$0xff] %vm22, %v319
  // Predicated region
  $region14: #{tpu_custom_call.1} parent=0 // pred_check
    _
  $region15: #{tpu_custom_call.1} parent=0 // pred_check_branch
    %329 = sbr.rel (0) target = $region17
  $region16: #{tpu_custom_call.1} parent=0 // pred_region
    _
  $region17: #{tpu_custom_call.1} parent=0 // pred_fallthru
    _
  // Predicated region
  $region18: #{tpu_custom_call.1} parent=0 // pred_check
    _
  $region19: #{tpu_custom_call.1} parent=0 // pred_check_branch
    %331 = sbr.rel (0) target = $region21
  $region20: #{tpu_custom_call.1} parent=0 // pred_region
    _
  $region21: #{tpu_custom_call.1} parent=0 // pred_fallthru
    _

</llo_original>
